<compile_context>
chip_gen: v7x
topology: tpu7x:2x2x1
jax: 0.10.0
libtpu: 0.0.40
codegen_flags: <defaults>
</compile_context>

<pallas_src>
import jax
import jax.numpy as jnp
from jax.experimental import pallas as pl
from jax.experimental.pallas import tpu as pltpu


HIDDEN = 256


def _round_up(x, m):
    return ((x + m - 1) // m) * m


def _pick_batch_tile(B, batch_tile):
    """Sublane-aligned batch tile; >=2 grid steps for large B (v7x megacore)."""
    if B <= 16:
        return _round_up(B, 8)
    tb = _round_up(min(batch_tile, _round_up(B, 16)), 16)
    if B > 128 and _round_up(B, tb) // tb < 2:
        tb = _round_up(pl.cdiv(B, 2), 16)
    return tb


def dqn_kernel(x_ref, w1_ref, b1_ref, w2_ref, b2_ref, w3_ref, b3_ref, o_ref):
    """Fused 3-layer MLP on one (TB, in_dim) batch tile.

    bf16 MXU operands + f32 accumulation for the two 256-wide layers; the N=1
    value head runs on the VPU (multiply) + XLU (lane reduce) instead of
    burning an MXU pass, and the result is stored lane-dense as (1, 1, TB).
    """
    tb = o_ref.shape[-1]

    # Layer 1: single matmul over the pre-concatenated [state | action] cols.
    h1 = jnp.dot(x_ref[...], w1_ref[...], preferred_element_type=jnp.float32)
    h1 = jnp.maximum(h1 + b1_ref[...], 0.0)          # f32 epilogue

    # Layer 2.
    h2 = jnp.dot(h1.astype(jnp.bfloat16), w2_ref[...],
                 preferred_element_type=jnp.float32)
    h2 = jnp.maximum(h2 + b2_ref[...], 0.0)

    # Value head: (TB,256)@(256,1) done as VPU mul + lane reduce (f32).
    v = jnp.sum(h2 * w3_ref[...], axis=-1, keepdims=True) + b3_ref[...]
    # Lane-dense store: transpose the (TB,1) column into a (1,1,TB) row.
    o_ref[...] = v.reshape(1, 1, tb).astype(o_ref.dtype)


def dqn_forward(state, action, params, *, batch_tile=512):
    """Pallas-backed DQN.forward(state, action) -> (B, 1) value."""
    w1, b1, w2, b2, w3, b3 = params
    B, state_dim = state.shape
    act_dim = action.shape[1]
    in_dim = state_dim + act_dim

    # Fused concat: done once in the wrapper (trivially cheap on (B, 4) data),
    # pre-cast to bf16 so input DMA bytes are halved and the kernel skips a
    # per-tile VPU cast.
    x = jnp.concatenate([state, action], axis=-1).astype(jnp.bfloat16)

    TB = _pick_batch_tile(B, batch_tile)
    B_pad = _round_up(B, TB)
    if B_pad != B:
        x = jnp.pad(x, ((0, B_pad - B), (0, 0)))
    n_tiles = B_pad // TB

    tiled_in = pl.BlockSpec((TB, in_dim), lambda i: (i, 0))
    pinned = lambda shape: pl.BlockSpec(shape, lambda i: (0, 0))

    in_specs = [
        tiled_in,                      # x = [state | action]   (bf16)
        pinned((in_dim, HIDDEN)),      # w1                     (bf16)
        pinned((1, HIDDEN)),           # b1                     (f32)
        pinned((HIDDEN, HIDDEN)),      # w2                     (bf16)
        pinned((1, HIDDEN)),           # b2                     (f32)
        pinned((1, HIDDEN)),           # w3 row (transposed)    (f32)
        pinned((1, 1)),                # b3                     (f32)
    ]
    # Lane-dense output slab: one (1, 1, TB) row per grid step.
    out_specs = pl.BlockSpec((1, 1, TB), lambda i: (i, 0, 0))

    flops = 2 * B_pad * (in_dim * HIDDEN + HIDDEN * HIDDEN + HIDDEN)
    weight_bytes = 2 * (in_dim * HIDDEN + HIDDEN * HIDDEN) + 4 * HIDDEN
    bias_bytes = 4 * (HIDDEN + HIDDEN + 1)
    io_bytes = 2 * B_pad * in_dim + 4 * B_pad
    cost = pl.CostEstimate(
        flops=int(flops),
        transcendentals=0,
        bytes_accessed=int(weight_bytes + bias_bytes + io_bytes),
    )

    out = pl.pallas_call(
        dqn_kernel,
        out_shape=jax.ShapeDtypeStruct((n_tiles, 1, TB), jnp.float32),
        grid=(n_tiles,),
        in_specs=in_specs,
        out_specs=out_specs,
        compiler_params=pltpu.CompilerParams(
            dimension_semantics=("parallel",)),
        cost_estimate=cost,
    )(x, w1, b1, w2, b2, w3, b3)

    return out.reshape(B_pad, 1)[:B]


def init_params(key, state_dim, act_dim):
    """Deterministic init mimicking nn.Linear's U(-1/sqrt(fan_in), +1/sqrt(fan_in)).

    MXU-layer weights stored in bfloat16 (halves weight HBM traffic, MXU
    native); the value-head weight is kept f32 and transposed to a (1, 256)
    row since it runs on the VPU. Biases are f32.
    """
    in_dim = state_dim + act_dim
    ks = jax.random.split(key, 6)

    def lin(kw, kb, fan_in, fan_out):
        bound = 1.0 / jnp.sqrt(jnp.float32(fan_in))
        w = jax.random.uniform(kw, (fan_in, fan_out), jnp.float32, -bound, bound)
        b = jax.random.uniform(kb, (1, fan_out), jnp.float32, -bound, bound)
        return w, b

    w1, b1 = lin(ks[0], ks[1], in_dim, HIDDEN)
    w2, b2 = lin(ks[2], ks[3], HIDDEN, HIDDEN)
    w3, b3 = lin(ks[4], ks[5], HIDDEN, 1)
    return (w1.astype(jnp.bfloat16), b1,
            w2.astype(jnp.bfloat16), b2,
            w3.T, b3)                      # w3.T: (1, 256) f32 row; b3: (1, 1)


def dqn_reference(state, action, params):
    """Pure-JAX reference mirroring the kernel's bf16-operand / f32-acc math."""
    w1, b1, w2, b2, w3row, b3 = params
    x = jnp.concatenate([state, action], axis=-1).astype(jnp.bfloat16)
    h1 = jnp.dot(x, w1, preferred_element_type=jnp.float32)
    h1 = jnp.maximum(h1 + b1, 0.0)
    h2 = jnp.dot(h1.astype(jnp.bfloat16), w2, preferred_element_type=jnp.float32)
    h2 = jnp.maximum(h2 + b2, 0.0)
    return jnp.sum(h2 * w3row, axis=-1, keepdims=True) + b3


if __name__ == "__main__":
    # Pendulum-v0: state_dim=3, act_dim=1. Small batch.
    B, STATE_DIM, ACT_DIM = 8, 3, 1

    key = jax.random.PRNGKey(0)
    k_state, k_action, k_params = jax.random.split(key, 3)

    state = jax.random.normal(k_state, (B, STATE_DIM), jnp.float32)
    action = jax.random.uniform(k_action, (B, ACT_DIM), jnp.float32, -1.0, 1.0)
    params = init_params(k_params, STATE_DIM, ACT_DIM)

    value = dqn_forward(state, action, params)
    value = jax.block_until_ready(value)

    ref = dqn_reference(state, action, params)
    assert value.shape == (B, 1), value.shape
    # bf16 MXU operands => looser tolerance than an f32 torch model.
    assert jnp.allclose(value, ref, atol=2e-2, rtol=2e-2), (
        "Pallas output diverged from reference"
    )

    # TODO(synk): DQN.val()'s .squeeze().cpu().item() is host-side scalar
    # extraction, not a kernel op; callers can use float(value[0, 0]).
    print("KERNEL_OK")
</pallas_src>

<mosaic_0001>
module attributes {stable_mosaic.version = 11 : i64} {
  func.func @dqn_kernel(%arg0: i32, %arg1: memref<8x4xbf16, #tpu.memory_space<vmem>>, %arg2: memref<4x256xbf16, #tpu.memory_space<vmem>>, %arg3: memref<1x256xf32, #tpu.memory_space<vmem>>, %arg4: memref<256x256xbf16, #tpu.memory_space<vmem>>, %arg5: memref<1x256xf32, #tpu.memory_space<vmem>>, %arg6: memref<1x256xf32, #tpu.memory_space<vmem>>, %arg7: memref<1x1xf32, #tpu.memory_space<vmem>>, %arg8: memref<1x1x8xf32, #tpu.memory_space<vmem>>) attributes {dimension_semantics = [#tpu.dimension_semantics<parallel>], iteration_bounds = array<i64: 1>, scalar_prefetch = 0 : i64, scratch_operands = 0 : i64, tpu.core_type = #tpu.core_type<tc>, window_params = [{transform_indices = @transform_0, window_bounds = array<i64: 8, 4>}, {pipeline_mode = #tpu.pipeline_mode<synchronous>, transform_indices = @transform_1, window_bounds = array<i64: 4, 256>}, {pipeline_mode = #tpu.pipeline_mode<synchronous>, transform_indices = @transform_2, window_bounds = array<i64: 1, 256>}, {pipeline_mode = #tpu.pipeline_mode<synchronous>, transform_indices = @transform_3, window_bounds = array<i64: 256, 256>}, {pipeline_mode = #tpu.pipeline_mode<synchronous>, transform_indices = @transform_4, window_bounds = array<i64: 1, 256>}, {pipeline_mode = #tpu.pipeline_mode<synchronous>, transform_indices = @transform_5, window_bounds = array<i64: 1, 256>}, {pipeline_mode = #tpu.pipeline_mode<synchronous>, transform_indices = @transform_6, window_bounds = array<i64: 1, 1>}, {transform_indices = @transform_7, window_bounds = array<i64: 1, 1, 8>}]} {
    %c0 = arith.constant 0 : index
    %c0_0 = arith.constant 0 : index
    %0 = vector.load %arg1[%c0, %c0_0] : memref<8x4xbf16, #tpu.memory_space<vmem>>, vector<8x4xbf16>
    %c0_1 = arith.constant 0 : index
    %c0_2 = arith.constant 0 : index
    %1 = vector.load %arg2[%c0_1, %c0_2] : memref<4x256xbf16, #tpu.memory_space<vmem>>, vector<4x256xbf16>
    %cst = arith.constant dense<0.000000e+00> : vector<8x256xf32>
    %2 = tpu.matmul %0, %1, %cst {dimension_numbers = #tpu.dot_dimension_numbers<[1], [0], [0], [1], [0, 0, 1, 1], [], []>} : vector<8x4xbf16>, vector<4x256xbf16>, vector<8x256xf32> -> vector<8x256xf32>
    %c0_3 = arith.constant 0 : index
    %c0_4 = arith.constant 0 : index
    %3 = vector.load %arg3[%c0_3, %c0_4] : memref<1x256xf32, #tpu.memory_space<vmem>>, vector<1x256xf32>
    %4 = vector.broadcast %3 : vector<1x256xf32> to vector<8x256xf32>
    %5 = arith.addf %2, %4 : vector<8x256xf32>
    %cst_5 = arith.constant 0.000000e+00 : f32
    %6 = vector.broadcast %cst_5 : f32 to vector<8x256xf32>
    %7 = arith.maximumf %5, %6 : vector<8x256xf32>
    %8 = arith.truncf %7 : vector<8x256xf32> to vector<8x256xbf16>
    %c0_6 = arith.constant 0 : index
    %c0_7 = arith.constant 0 : index
    %9 = vector.load %arg4[%c0_6, %c0_7] : memref<256x256xbf16, #tpu.memory_space<vmem>>, vector<256x256xbf16>
    %cst_8 = arith.constant dense<0.000000e+00> : vector<8x256xf32>
    %10 = tpu.matmul %8, %9, %cst_8 {dimension_numbers = #tpu.dot_dimension_numbers<[1], [0], [0], [1], [0, 0, 1, 1], [], []>} : vector<8x256xbf16>, vector<256x256xbf16>, vector<8x256xf32> -> vector<8x256xf32>
    %c0_9 = arith.constant 0 : index
    %c0_10 = arith.constant 0 : index
    %11 = vector.load %arg5[%c0_9, %c0_10] : memref<1x256xf32, #tpu.memory_space<vmem>>, vector<1x256xf32>
    %12 = vector.broadcast %11 : vector<1x256xf32> to vector<8x256xf32>
    %13 = arith.addf %10, %12 : vector<8x256xf32>
    %cst_11 = arith.constant 0.000000e+00 : f32
    %14 = vector.broadcast %cst_11 : f32 to vector<8x256xf32>
    %15 = arith.maximumf %13, %14 : vector<8x256xf32>
    %c0_12 = arith.constant 0 : index
    %c0_13 = arith.constant 0 : index
    %16 = vector.load %arg6[%c0_12, %c0_13] : memref<1x256xf32, #tpu.memory_space<vmem>>, vector<1x256xf32>
    %17 = vector.broadcast %16 : vector<1x256xf32> to vector<8x256xf32>
    %18 = arith.mulf %15, %17 : vector<8x256xf32>
    %cst_14 = arith.constant dense<0.000000e+00> : vector<8xf32>
    %19 = vector.multi_reduction <add>, %18, %cst_14 [1] : vector<8x256xf32> to vector<8xf32>
    %20 = vector.shape_cast %19 : vector<8xf32> to vector<8x1xf32>
    %c0_15 = arith.constant 0 : index
    %c0_16 = arith.constant 0 : index
    %21 = vector.load %arg7[%c0_15, %c0_16] : memref<1x1xf32, #tpu.memory_space<vmem>>, vector<1x1xf32>
    %22 = vector.broadcast %21 : vector<1x1xf32> to vector<8x1xf32>
    %23 = arith.addf %20, %22 : vector<8x1xf32>
    %24 = vector.shape_cast %23 : vector<8x1xf32> to vector<1x1x8xf32>
    %c0_17 = arith.constant 0 : index
    %c0_18 = arith.constant 0 : index
    %c0_19 = arith.constant 0 : index
    %25 = vector.load %arg8[%c0_17, %c0_18, %c0_19] : memref<1x1x8xf32, #tpu.memory_space<vmem>>, vector<1x1x8xf32>
    tpu.vector_store %arg8[%c0_17, %c0_18, %c0_19], %24 {strides = array<i32>} : memref<1x1x8xf32, #tpu.memory_space<vmem>>, vector<1x1x8xf32>,
    return
  }
  func.func @transform_0(%arg0: i32) -> (i32, i32) {
    %c0_i32 = arith.constant 0 : i32
    %c0_i32_0 = arith.constant 0 : i32
    return %arg0, %c0_i32 : i32, i32
  }
  func.func @transform_1(%arg0: i32) -> (i32, i32) {
    %c0_i32 = arith.constant 0 : i32
    %c0_i32_0 = arith.constant 0 : i32
    %c0_i32_1 = arith.constant 0 : i32
    return %c0_i32, %c0_i32_0 : i32, i32
  }
  func.func @transform_2(%arg0: i32) -> (i32, i32) {
    %c0_i32 = arith.constant 0 : i32
    %c0_i32_0 = arith.constant 0 : i32
    %c0_i32_1 = arith.constant 0 : i32
    return %c0_i32, %c0_i32_0 : i32, i32
  }
  func.func @transform_3(%arg0: i32) -> (i32, i32) {
    %c0_i32 = arith.constant 0 : i32
    %c0_i32_0 = arith.constant 0 : i32
    %c0_i32_1 = arith.constant 0 : i32
    return %c0_i32, %c0_i32_0 : i32, i32
  }
  func.func @transform_4(%arg0: i32) -> (i32, i32) {
    %c0_i32 = arith.constant 0 : i32
    %c0_i32_0 = arith.constant 0 : i32
    %c0_i32_1 = arith.constant 0 : i32
    return %c0_i32, %c0_i32_0 : i32, i32
  }
  func.func @transform_5(%arg0: i32) -> (i32, i32) {
    %c0_i32 = arith.constant 0 : i32
    %c0_i32_0 = arith.constant 0 : i32
    %c0_i32_1 = arith.constant 0 : i32
    return %c0_i32, %c0_i32_0 : i32, i32
  }
  func.func @transform_6(%arg0: i32) -> (i32, i32) {
    %c0_i32 = arith.constant 0 : i32
    %c0_i32_0 = arith.constant 0 : i32
    %c0_i32_1 = arith.constant 0 : i32
    return %c0_i32, %c0_i32_0 : i32, i32
  }
  func.func @transform_7(%arg0: i32) -> (i32, i32, i32) {
    %c0_i32 = arith.constant 0 : i32
    %c0_i32_0 = arith.constant 0 : i32
    %c0_i32_1 = arith.constant 0 : i32
    return %arg0, %c0_i32, %c0_i32_0 : i32, i32, i32
  }
}

</mosaic_0001>

<llo_original>
// kernel: tpu_custom_call.1
$region0: #{tpu_custom_call.1}
  #allocation0 [shape = 'u32[]', space=smem, size = 0x4, offset = 0x4, fixed_abs, tag = 'smem constant byte address 0x4 - core index']
  #allocation1 [shape = 'u32[144,128]{1,0:T(1,128)}', space=vmem, size = 0x12000, scoped, tag = 'internal scratch']
  #allocation2 [shape = 'f32[1,1]{1,0:T(1,128)S(1)}', space=vmem, size = 0x200, scoped, tag = 'scoped memory for tpu_custom_call.1']
  %s0 = inlined_call_operand.vmem [shape: bf16[8,4], index: 0, kind: input, shape index: {}]
  %s1 = inlined_call_operand.vmem [shape: bf16[4,256], index: 1, kind: input, shape index: {}]
  %s2 = inlined_call_operand.vmem [shape: f32[1,256], index: 2, kind: input, shape index: {}]
  %s3 = inlined_call_operand.hbm [shape: bf16[256,256], index: 3, kind: input, shape index: {}]
  %s4 = inlined_call_operand.vmem [shape: f32[1,256], index: 4, kind: input, shape index: {}]
  %s5 = inlined_call_operand.vmem [shape: f32[1,256], index: 5, kind: input, shape index: {}]
  %s6 = inlined_call_operand.<no memory space> [shape: f32[1,1], index: 6, kind: input, shape index: {}]
  %s7 = inlined_call_operand.hbm [shape: f32[1,1,8], index: 7, kind: output, shape index: {}]
  %s8 = sld [smem:[#allocation0]]
  $region42: #{tpu_custom_call.1} parent=0
    _
  %s10 = ssub.s32 1, %s8
  %s11 = scalar_select 0, %s10, %s8
  %v12 = vstv %s6
  %13 = vst [vmem:[#allocation2] sm:$0x1] %v12
  $region1: #{tpu_custom_call.1} parent=0
    #allocation3 [shape = 'u8[131072]{0}', space=vmem, size = 0x20000, scoped, tag = 'input window, operand 3, single buffered']
    #allocation4 [shape = 's32[1]{0}', space=sflag, size = 0x4, scoped, tag = 'scoped memory for tpu_custom_call.1']
    #allocation5 [shape = 's32[1]{0}', space=sflag, size = 0x4, scoped, tag = 'scoped memory for tpu_custom_call.1']
    #allocation6 [shape = 'u8[512]{0}', space=vmem, size = 0x400, scoped, tag = 'output window, operand 0, single buffered']
    %14 = vsyncpa [#allocation4], 0
    %15 = vsyncpa [#allocation5], 0
    // Predicated region
    $region2: #{tpu_custom_call.1} parent=1 // pred_check
      _
    $region3: #{tpu_custom_call.1} parent=1 // pred_check_branch
      %17 = sbr.rel (0) target = $region5
    $region4: #{tpu_custom_call.1} parent=1 // pred_region
      _
    $region5: #{tpu_custom_call.1} parent=1 // pred_fallthru
      _
    // Predicated region
    $region6: #{tpu_custom_call.1} parent=1 // pred_check
      _
    $region7: #{tpu_custom_call.1} parent=1 // pred_check_branch
      %19 = sbr.rel (0) target = $region9
    $region8: #{tpu_custom_call.1} parent=1 // pred_region
      _
    $region9: #{tpu_custom_call.1} parent=1 // pred_fallthru
      _
    // Predicated region
    $region10: #{tpu_custom_call.1} parent=1 // pred_check
      _
    $region11: #{tpu_custom_call.1} parent=1 // pred_check_branch
      %21 = sbr.rel (0) target = $region13
    $region12: #{tpu_custom_call.1} parent=1 // pred_region
      _
    $region13: #{tpu_custom_call.1} parent=1 // pred_fallthru
      _
    // Predicated region
    $region14: #{tpu_custom_call.1} parent=1 // pred_check
      _
    $region15: #{tpu_custom_call.1} parent=1 // pred_check_branch
      %23 = sbr.rel (0) target = $region17
    $region16: #{tpu_custom_call.1} parent=1 // pred_region
      %s25 = ssub.s32 4096, 4096
      %26 = vsyncadd [#allocation4], %s25
      %s27 = sshll.u32 [#allocation3], 4
      %s28 = int_to_ptr.vmem [resolvable:$true] %s27
      %33 = dma.hbm_to_vmem [thread:$0]  %s3, 4096, %s28, [#allocation4], 128, 128, 8
    $region17: #{tpu_custom_call.1} parent=1 // pred_fallthru
      _
    // Predicated region
    $region18: #{tpu_custom_call.1} parent=1 // pred_check
      _
    $region19: #{tpu_custom_call.1} parent=1 // pred_check_branch
      %35 = sbr.rel (0) target = $region21
    $region20: #{tpu_custom_call.1} parent=1 // pred_region
      _
    $region21: #{tpu_custom_call.1} parent=1 // pred_fallthru
      _
    // Predicated region
    $region22: #{tpu_custom_call.1} parent=1 // pred_check
      _
    $region23: #{tpu_custom_call.1} parent=1 // pred_check_branch
      %37 = sbr.rel (0) target = $region25
    $region24: #{tpu_custom_call.1} parent=1 // pred_region
      _
    $region25: #{tpu_custom_call.1} parent=1 // pred_fallthru
      _
    // Predicated region
    $region26: #{tpu_custom_call.1} parent=1 // pred_check
      _
    $region27: #{tpu_custom_call.1} parent=1 // pred_check_branch
      %39 = sbr.rel (0) target = $region29
    $region28: #{tpu_custom_call.1} parent=1 // pred_region
      _
    $region29: #{tpu_custom_call.1} parent=1 // pred_fallthru
      _
    // Predicated region
    $region30: #{tpu_custom_call.1} parent=1 // pred_check
      _
    $region31: #{tpu_custom_call.1} parent=1 // pred_check_branch
      %41 = sbr.rel (0) target = $region33
    $region32: #{tpu_custom_call.1} parent=1 // pred_region
      %42 = dma.done [#allocation4], 4096
    $region33: #{tpu_custom_call.1} parent=1 // pred_fallthru
      _
    %v44 = vld [vmem:[%s0] sm:$0xf]
    %v45 = vld [vmem:[%s1] sm:$0xf]
    %v46 = vld [vmem:[%s2] sm:$0x3]
    %v48 = vlaneseq
    %v49 = vshrl.u32 %v48, 7
    %v50 = vsub.s32 0, %v49
    %v51 = vrot.slane %v46, %v50
    %v52 = vlaneseq
    %v53 = vshrl.u32 %v52, 7
    %v54 = vsub.s32 1, %v53
    %v55 = vrot.slane %v46, %v54
    %v60 = vunpack.c.l.s4 1983009808
    %v61 = vunpack.c.0.s8 %v60
    %v62 = vlaneseq
    %v63 = vshrl.u32 %v62, 7
    %v64 = vsub.s32 %v61, %v63
    %v65 = vrot.slane %v45, %v64
    %v66 = vcombine.high %v65, %v65
    %vm67 = vcmask 31744
    %v69 = vsel %vm67, %v44, 0
    %vm71 = vcmask 1041408
    %v73 = vsel %vm71, %v65, 0
    %v76 = vsel %vm71, %v66, 0
    %78 = vmatprep.subr.bf16.mxu0 %v76
    %79 = vmatpush1.bf16.msra.mxu0 %v73
    %80 = vmatprep.subr.bf16.mxu0 0
    %81 = vmatpush1.bf16.msra.mxu0 0
    %82 = vmatprep.subr.bf16.mxu0 0
    %83 = vmatpush1.bf16.msra.mxu0 0
    %84 = vmatprep.subr.bf16.mxu0 0
    %85 = vmatpush1.bf16.msra.mxu0 0
    %86 = vmatprep.subr.bf16.mxu0 0
    %87 = vmatpush1.bf16.msra.mxu0 0
    %88 = vmatprep.subr.bf16.mxu0 0
    %89 = vmatpush1.bf16.msra.mxu0 0
    %90 = vmatprep.subr.bf16.mxu0 0
    %91 = vmatpush1.bf16.msra.mxu0 0
    %92 = vmatprep.subr.bf16.mxu0 0
    %93 = vmatpush1.bf16.msra.mxu0 0
    %94 = vmatprep.subr.bf16.mxu0 0
    %95 = vmatpush1.bf16.msra.mxu0 0
    %96 = vmatprep.subr.bf16.mxu0 0
    %97 = vmatpush1.bf16.msra.mxu0 0
    %98 = vmatprep.subr.bf16.mxu0 0
    %99 = vmatpush1.bf16.msra.mxu0 0
    %100 = vmatprep.subr.bf16.mxu0 0
    %101 = vmatpush1.bf16.msra.mxu0 0
    %102 = vmatprep.subr.bf16.mxu0 0
    %103 = vmatpush1.bf16.msra.mxu0 0
    %104 = vmatprep.subr.bf16.mxu0 0
    %105 = vmatpush1.bf16.msra.mxu0 0
    %106 = vmatprep.subr.bf16.mxu0 0
    %107 = vmatpush1.bf16.msra.mxu0 0
    %108 = vmatprep.subr.bf16.mxu0 0
    %109 = vmatpush1.bf16.msra.mxu0 0
    %110 = vmatprep.mubr.bf16.mxu0 0
    %111 = vmatmul.mubr.bf16.gmra.mrb[0].mxu0 %v69
    %v112 = vpop.f32.mrb[0].mxu0
    %v113 = vadd.f32 %v51, %v112
    %v114 = vpop.f32.mrb[0].mxu0
    %v115 = vadd.f32 %v55, %v114
    %v116 = vpop.f32.mrb[0].mxu0
    %v117 = vpop.f32.mrb[0].mxu0
    %118 = vdwg.mxu0
    %v119 = vmax.f32 %v113, 0.0
    %v120 = vmax.f32 %v115, 0.0
    %v121 = vpack.c.bf16 %v119, %v119
    %v122 = vpack.c.bf16 %v120, %v120
    %v123 = vld [vmem:[#allocation3] sm:$0xff]
    %v124 = vld [vmem:[#allocation3 + $0x8] sm:$0xff]
    %v125 = vld [vmem:[#allocation3 + $0x10] sm:$0xff]
    %v126 = vld [vmem:[#allocation3 + $0x18] sm:$0xff]
    %v127 = vld [vmem:[#allocation3 + $0x20] sm:$0xff]
    %v128 = vld [vmem:[#allocation3 + $0x28] sm:$0xff]
    %v129 = vld [vmem:[#allocation3 + $0x30] sm:$0xff]
    %v130 = vld [vmem:[#allocation3 + $0x38] sm:$0xff]
    %v131 = vld [vmem:[#allocation3 + $0x40] sm:$0xff]
    %v132 = vld [vmem:[#allocation3 + $0x48] sm:$0xff]
    %v133 = vld [vmem:[#allocation3 + $0x50] sm:$0xff]
    %v134 = vld [vmem:[#allocation3 + $0x58] sm:$0xff]
    %v135 = vld [vmem:[#allocation3 + $0x60] sm:$0xff]
    %v136 = vld [vmem:[#allocation3 + $0x68] sm:$0xff]
    %v137 = vld [vmem:[#allocation3 + $0x70] sm:$0xff]
    %v138 = vld [vmem:[#allocation3 + $0x78] sm:$0xff]
    %v139 = vld [vmem:[#allocation3 + $0x80] sm:$0xff]
    %v140 = vld [vmem:[#allocation3 + $0x88] sm:$0xff]
    %v141 = vld [vmem:[#allocation3 + $0x90] sm:$0xff]
    %v142 = vld [vmem:[#allocation3 + $0x98] sm:$0xff]
    %v143 = vld [vmem:[#allocation3 + $0xa0] sm:$0xff]
    %v144 = vld [vmem:[#allocation3 + $0xa8] sm:$0xff]
    %v145 = vld [vmem:[#allocation3 + $0xb0] sm:$0xff]
    %v146 = vld [vmem:[#allocation3 + $0xb8] sm:$0xff]
    %v147 = vld [vmem:[#allocation3 + $0xc0] sm:$0xff]
    %v148 = vld [vmem:[#allocation3 + $0xc8] sm:$0xff]
    %v149 = vld [vmem:[#allocation3 + $0xd0] sm:$0xff]
    %v150 = vld [vmem:[#allocation3 + $0xd8] sm:$0xff]
    %v151 = vld [vmem:[#allocation3 + $0xe0] sm:$0xff]
    %v152 = vld [vmem:[#allocation3 + $0xe8] sm:$0xff]
    %v153 = vld [vmem:[#allocation3 + $0xf0] sm:$0xff]
    %v154 = vld [vmem:[#allocation3 + $0xf8] sm:$0xff]
    %v155 = vld [vmem:[%s4] sm:$0x3]
    %v157 = vlaneseq
    %v158 = vshrl.u32 %v157, 7
    %v159 = vsub.s32 0, %v158
    %v160 = vrot.slane %v155, %v159
    %v161 = vlaneseq
    %v162 = vshrl.u32 %v161, 7
    %v163 = vsub.s32 1, %v162
    %v164 = vrot.slane %v155, %v163
    %v199 = vunpack.c.l.b16 %v123
    %v200 = vunpack.c.h.b16 %v123
    %v201 = vunpack.c.l.b16 %v124
    %v202 = vunpack.c.h.b16 %v124
    %v203 = vunpack.c.l.b16 %v125
    %v204 = vunpack.c.h.b16 %v125
    %v205 = vunpack.c.l.b16 %v126
    %v206 = vunpack.c.h.b16 %v126
    %v207 = vunpack.c.l.b16 %v127
    %v208 = vunpack.c.h.b16 %v127
    %v209 = vunpack.c.l.b16 %v128
    %v210 = vunpack.c.h.b16 %v128
    %v211 = vunpack.c.l.b16 %v129
    %v212 = vunpack.c.h.b16 %v129
    %v213 = vunpack.c.l.b16 %v130
    %v214 = vunpack.c.h.b16 %v130
    %v215 = vunpack.c.l.b16 %v131
    %v216 = vunpack.c.h.b16 %v131
    %v217 = vunpack.c.l.b16 %v132
    %v218 = vunpack.c.h.b16 %v132
    %v219 = vunpack.c.l.b16 %v133
    %v220 = vunpack.c.h.b16 %v133
    %v221 = vunpack.c.l.b16 %v134
    %v222 = vunpack.c.h.b16 %v134
    %v223 = vunpack.c.l.b16 %v135
    %v224 = vunpack.c.h.b16 %v135
    %v225 = vunpack.c.l.b16 %v136
    %v226 = vunpack.c.h.b16 %v136
    %v227 = vunpack.c.l.b16 %v137
    %v228 = vunpack.c.h.b16 %v137
    %v229 = vunpack.c.l.b16 %v138
    %v230 = vunpack.c.h.b16 %v138
    %v231 = vunpack.c.l.b16 %v139
    %v232 = vunpack.c.h.b16 %v139
    %v233 = vunpack.c.l.b16 %v140
    %v234 = vunpack.c.h.b16 %v140
    %v235 = vunpack.c.l.b16 %v141
    %v236 = vunpack.c.h.b16 %v141
    %v237 = vunpack.c.l.b16 %v142
    %v238 = vunpack.c.h.b16 %v142
    %v239 = vunpack.c.l.b16 %v143
    %v240 = vunpack.c.h.b16 %v143
    %v241 = vunpack.c.l.b16 %v144
    %v242 = vunpack.c.h.b16 %v144
    %v243 = vunpack.c.l.b16 %v145
    %v244 = vunpack.c.h.b16 %v145
    %v245 = vunpack.c.l.b16 %v146
    %v246 = vunpack.c.h.b16 %v146
    %v247 = vunpack.c.l.b16 %v147
    %v248 = vunpack.c.h.b16 %v147
    %v249 = vunpack.c.l.b16 %v148
    %v250 = vunpack.c.h.b16 %v148
    %v251 = vunpack.c.l.b16 %v149
    %v252 = vunpack.c.h.b16 %v149
    %v253 = vunpack.c.l.b16 %v150
    %v254 = vunpack.c.h.b16 %v150
    %v255 = vunpack.c.l.b16 %v151
    %v256 = vunpack.c.h.b16 %v151
    %v257 = vunpack.c.l.b16 %v152
    %v258 = vunpack.c.h.b16 %v152
    %v259 = vunpack.c.l.b16 %v153
    %v260 = vunpack.c.h.b16 %v153
    %v261 = vunpack.c.l.b16 %v154
    %v262 = vunpack.c.h.b16 %v154
    %v263 = vpack.c.b16 %v201, %v199
    %v264 = vpack.c.b16 %v202, %v200
    %v265 = vpack.c.b16 %v205, %v203
    %v266 = vpack.c.b16 %v206, %v204
    %v267 = vpack.c.b16 %v209, %v207
    %v268 = vpack.c.b16 %v210, %v208
    %v269 = vpack.c.b16 %v213, %v211
    %v270 = vpack.c.b16 %v214, %v212
    %v271 = vpack.c.b16 %v217, %v215
    %v272 = vpack.c.b16 %v218, %v216
    %v273 = vpack.c.b16 %v221, %v219
    %v274 = vpack.c.b16 %v222, %v220
    %v275 = vpack.c.b16 %v225, %v223
    %v276 = vpack.c.b16 %v226, %v224
    %v277 = vpack.c.b16 %v229, %v227
    %v278 = vpack.c.b16 %v230, %v228
    %v279 = vpack.c.b16 %v233, %v231
    %v280 = vpack.c.b16 %v234, %v232
    %v281 = vpack.c.b16 %v237, %v235
    %v282 = vpack.c.b16 %v238, %v236
    %v283 = vpack.c.b16 %v241, %v239
    %v284 = vpack.c.b16 %v242, %v240
    %v285 = vpack.c.b16 %v245, %v243
    %v286 = vpack.c.b16 %v246, %v244
    %v287 = vpack.c.b16 %v249, %v247
    %v288 = vpack.c.b16 %v250, %v248
    %v289 = vpack.c.b16 %v253, %v251
    %v290 = vpack.c.b16 %v254, %v252
    %v291 = vpack.c.b16 %v257, %v255
    %v292 = vpack.c.b16 %v258, %v256
    %v293 = vpack.c.b16 %v261, %v259
    %v294 = vpack.c.b16 %v262, %v260
    %327 = vmatprep.subr.bf16.mxu0 %v264
    %328 = vmatpush1.bf16.msra.mxu0 %v263
    %329 = vmatprep.subr.bf16.mxu0 %v266
    %330 = vmatpush1.bf16.msra.mxu0 %v265
    %331 = vmatprep.subr.bf16.mxu0 %v268
    %332 = vmatpush1.bf16.msra.mxu0 %v267
    %333 = vmatprep.subr.bf16.mxu0 %v270
    %334 = vmatpush1.bf16.msra.mxu0 %v269
    %335 = vmatprep.subr.bf16.mxu0 %v272
    %336 = vmatpush1.bf16.msra.mxu0 %v271
    %337 = vmatprep.subr.bf16.mxu0 %v274
    %338 = vmatpush1.bf16.msra.mxu0 %v273
    %339 = vmatprep.subr.bf16.mxu0 %v276
    %340 = vmatpush1.bf16.msra.mxu0 %v275
    %341 = vmatprep.subr.bf16.mxu0 %v278
    %342 = vmatpush1.bf16.msra.mxu0 %v277
    %343 = vmatprep.subr.bf16.mxu0 %v280
    %344 = vmatpush1.bf16.msra.mxu0 %v279
    %345 = vmatprep.subr.bf16.mxu0 %v282
    %346 = vmatpush1.bf16.msra.mxu0 %v281
    %347 = vmatprep.subr.bf16.mxu0 %v284
    %348 = vmatpush1.bf16.msra.mxu0 %v283
    %349 = vmatprep.subr.bf16.mxu0 %v286
    %350 = vmatpush1.bf16.msra.mxu0 %v285
    %351 = vmatprep.subr.bf16.mxu0 %v288
    %352 = vmatpush1.bf16.msra.mxu0 %v287
    %353 = vmatprep.subr.bf16.mxu0 %v290
    %354 = vmatpush1.bf16.msra.mxu0 %v289
    %355 = vmatprep.subr.bf16.mxu0 %v292
    %356 = vmatpush1.bf16.msra.mxu0 %v291
    %357 = vmatprep.subr.bf16.mxu0 %v294
    %358 = vmatpush1.bf16.msra.mxu0 %v293
    %359 = vmatprep.mubr.bf16.mxu0 %v122
    %360 = vmatmul.mubr.bf16.gmra.mrb[0].mxu0 %v121
    %v361 = vpop.f32.mrb[0].mxu0
    %v362 = vadd.f32 %v160, %v361
    %v363 = vpop.f32.mrb[0].mxu0
    %v364 = vadd.f32 %v164, %v363
    %v365 = vpop.f32.mrb[0].mxu0
    %v366 = vpop.f32.mrb[0].mxu0
    %367 = vdwg.mxu0
    %v368 = vmax.f32 %v362, 0.0
    %v369 = vmax.f32 %v364, 0.0
    %v370 = vld [vmem:[%s5] sm:$0x3]
    %v372 = vlaneseq
    %v373 = vshrl.u32 %v372, 7
    %v374 = vsub.s32 0, %v373
    %v375 = vrot.slane %v370, %v374
    %v376 = vlaneseq
    %v377 = vshrl.u32 %v376, 7
    %v378 = vsub.s32 1, %v377
    %v379 = vrot.slane %v370, %v378
    %v382 = vmul.f32 %v368, %v375
    %v383 = vmul.f32 %v369, %v379
    %v384 = vadd.f32 %v382, %v383
    %385 = vadd.xlane.f32.xlu0 %v384
    %v386 = vpop.xlane.xlu0 %385
    %v387 = vld [vmem:[#allocation2] sm:$0x1]
    %v389 = vlaneseq
    %v390 = vshrl.u32 %v389, 7
    %v391 = vsub.s32 0, %v390
    %v392 = vrot.slane %v387, %v391
    %v394 = vadd.f32 %v386, %v392
    %396 = vset.pattern.permute.xlu0 0
    %397 = vperm.xlu0 %396, %v394
    %v398 = vpop.permute.xlu0 %397
    %v399 = vlaneseq
    %v400 = vand.u32 %v399, 127
    %v401 = vlaneseq
    %v402 = vshrl.u32 %v401, 7
    %v403 = vsub.s32 %v400, %v402
    %v404 = vrot.slane %v398, %v403
    %vm406 = vcmask 57344
    %407 = vst.msk [vmem:[#allocation6] sm:$0x1] %vm406, %v404
    // Predicated region
    $region34: #{tpu_custom_call.1} parent=1 // pred_check
      _
    $region35: #{tpu_custom_call.1} parent=1 // pred_check_branch
      %409 = sbr.rel (0) target = $region37
    $region36: #{tpu_custom_call.1} parent=1 // pred_region
      %s411 = ssub.s32 16, 16
      %412 = vsyncadd [#allocation5], %s411
      %s414 = sshll.u32 [#allocation6], 4
      %s415 = int_to_ptr.vmem [resolvable:$true] %s414
      %417 = dma.vmem_to_hbm [thread:$0]  %s415, 16, %s7, [#allocation5]
    $region37: #{tpu_custom_call.1} parent=1 // pred_fallthru
      _
    // Predicated region
    $region38: #{tpu_custom_call.1} parent=1 // pred_check
      _
    $region39: #{tpu_custom_call.1} parent=1 // pred_check_branch
      %419 = sbr.rel (0) target = $region41
    $region40: #{tpu_custom_call.1} parent=1 // pred_region
      %420 = dma.done [#allocation5], 16
    $region41: #{tpu_custom_call.1} parent=1 // pred_fallthru
      _
    %421 = vsyncpa [#allocation4], 1
    %422 = vsyncpa [#allocation5], 1

</llo_original>
